<compile_context>
chip_gen: v7x
topology: tpu7x:2x2x1
jax: 0.10.0
libtpu: 0.0.40
codegen_flags: <defaults>
</compile_context>

<pallas_src>
import math
from functools import partial

import numpy as np
import jax
import jax.numpy as jnp
from jax.experimental import pallas as pl
from jax.experimental.pallas import tpu as pltpu


_LANE = 128
_SUBLANE = 8


def _round_up(x, m):
    return ((x + m - 1) // m) * m


def _vmem_budget():
    """Generation-aware (VMEM working-set budget, scoped VMEM limit) in bytes."""
    cap = 64 * 1024 * 1024                       # conservative default (v7x physical)
    try:
        cap = int(getattr(pltpu.get_tpu_info(), "vmem_capacity_bytes", cap))
    except Exception:
        pass
    limit = min(cap // 2, 100 * 1024 * 1024)     # v5e/v6e: 64 MiB, v7x: 32 MiB
    budget = min(cap // 3, 48 * 1024 * 1024)     # working-set target with headroom
    return budget, limit


# ---------------------------------------------------------------------------
# Exact one-hot gather on the MXU at DEFAULT precision.
# ---------------------------------------------------------------------------
def _onehot_gather_dot(sel, x, *, sel_on_left):
    """Exact gather via one-hot matmul (sel is a bf16 0/1 matrix with exactly one
    1 per gathered output).  bf16 x: one default-precision pass.  Other float
    dtypes: split into three bf16 terms; each gathered exactly, re-summed
    small-to-large so the original value is rebuilt exactly (normal range)."""
    def dot(a):
        if sel_on_left:
            return jnp.dot(sel, a, preferred_element_type=jnp.float32)
        return jnp.dot(a, sel, preferred_element_type=jnp.float32)

    if x.dtype == jnp.bfloat16:
        return dot(x)
    xf = x.astype(jnp.float32)
    hi = xf.astype(jnp.bfloat16)
    rem = xf - hi.astype(jnp.float32)
    mid = rem.astype(jnp.bfloat16)
    lo = (rem - mid.astype(jnp.float32)).astype(jnp.bfloat16)
    return dot(lo) + dot(mid) + dot(hi)         # (lo+mid)+hi == x exactly


# ---------------------------------------------------------------------------
# Kernels.
# ---------------------------------------------------------------------------
def _gather_matmul_kernel(x_ref, sel_ref, o_ref):
    # x_ref: (rb, g*Win); sel_ref: (g*Win, g*kh*kw*Win); o_ref: (rb, g*kh*kw*Win)
    o_ref[...] = _onehot_gather_dot(
        sel_ref[...], x_ref[...], sel_on_left=False).astype(o_ref.dtype)


def _h_repeat_kernel(x_ref, o_ref, *, kh):
    # Pure H repeat (kw == 1): kh sliced stores, no selector, no MXU.
    y = x_ref[...]
    w = y.shape[-1]
    for r in range(kh):
        o_ref[:, r * w:(r + 1) * w] = y


def _nearest_general_kernel(sel_h_ref, sel_wT_ref, x_ref, o_ref):
    # sel_h: (Hout, Hin), sel_wT: (Win, Wout) -- bf16 one-hot.
    # x_ref: (P, Hin, Win); o_ref: (P, Hout, Wout).  fori over the fused planes.
    sel_h = sel_h_ref[...]
    sel_wT = sel_wT_ref[...]
    n_planes = x_ref.shape[0]

    def body(p, carry):
        xp = x_ref[p]                                           # (Hin, Win)
        t = _onehot_gather_dot(sel_h, xp, sel_on_left=True)     # (Hout, Win) f32
        if x_ref.dtype == jnp.bfloat16:
            t = t.astype(jnp.bfloat16)        # exact: values are bf16 copies
        o = _onehot_gather_dot(sel_wT, t, sel_on_left=False)    # (Hout, Wout)
        o_ref[p] = o.astype(o_ref.dtype)
        return carry

    jax.lax.fori_loop(0, n_planes, body, 0)


# ---------------------------------------------------------------------------
# Tiling helpers.
# ---------------------------------------------------------------------------
def _pick_row_tile(rows, in_row_bytes, out_row_bytes, resident_bytes, budget):
    """Rows per grid step: biggest tile under the VMEM budget, aiming for >= 8
    grid steps unless tiles would drop below ~1 MiB of input."""
    per_row = (in_row_bytes + out_row_bytes) * 2            # double-buffered
    avail = max(budget - resident_bytes, per_row * _SUBLANE)
    cap = max(_SUBLANE, avail // per_row)
    floor_rows = max(_SUBLANE, -(-(1 << 20) // max(in_row_bytes, 1)))
    want = int(min(cap, max(-(-rows // 8), floor_rows)))
    if want >= rows:
        return rows
    best = 0
    for d in range(_SUBLANE, want + 1, _SUBLANE):
        if rows % d == 0:
            best = d
    if best:
        return best
    # No aligned divisor: aligned non-dividing tile; Pallas masks the OOB tail.
    return max(_SUBLANE, (want // _SUBLANE) * _SUBLANE)


def _pick_plane_count(NC, plane_io_bytes, resident_bytes, budget):
    per_plane = plane_io_bytes * 2                          # double-buffered
    avail = max(budget - resident_bytes, per_plane)
    cap = max(1, avail // per_plane)
    floor_p = max(1, -(-(1 << 20) // max(plane_io_bytes, 1)))
    want = int(min(cap, max(-(-NC // 8), floor_p)))
    if want >= NC:
        return NC
    best = 1
    for d in range(1, want + 1):
        if NC % d == 0:
            best = d
    return best


def _choose_row_fusion(rows_total, Win, kh, kw):
    """Fuse g input rows per slab row so the output row is lane-dense (>=256
    lanes) while keeping the gather contraction dim modest (<=256)."""
    out_w = kh * kw * Win
    if out_w >= 2 * _LANE:
        return 1
    g = 1
    for cand in range(2, 129):
        if cand * Win > 2 * _LANE:
            break
        if rows_total % cand != 0:
            continue
        g = cand
        if g * out_w >= 2 * _LANE:
            break
    return g


# ---------------------------------------------------------------------------
# Fast path: integer upsampling ratios (kh, kw).
# ---------------------------------------------------------------------------
def _nearest_upsample_integer(x, kh, kw):
    N, C, Hin, Win = x.shape
    Hout, Wout = Hin * kh, Win * kw
    if kh == 1 and kw == 1:
        return x

    R = N * C * Hin                               # total input rows (NCHW-flat)
    bpe = x.dtype.itemsize
    budget, limit = _vmem_budget()

    if kw == 1:
        # Pure H repeat: copy kernel (no selector, no MXU, exact for all values).
        x2d = x.reshape(R, Win)                                     # free view
        in_row = _round_up(Win, _LANE) * bpe
        out_row = _round_up(kh * Win, _LANE) * bpe
        rb = _pick_row_tile(R, in_row, out_row, 0, budget)
        out2d = pl.pallas_call(
            partial(_h_repeat_kernel, kh=kh),
            out_shape=jax.ShapeDtypeStruct((R, kh * Win), x.dtype),
            grid=(pl.cdiv(R, rb),),
            in_specs=[pl.BlockSpec((rb, Win), lambda i: (i, 0))],
            out_specs=pl.BlockSpec((rb, kh * Win), lambda i: (i, 0)),
            compiler_params=pltpu.CompilerParams(
                dimension_semantics=("parallel",),
                vmem_limit_bytes=limit),
            cost_estimate=pl.CostEstimate(
                flops=0, transcendentals=0,
                bytes_accessed=int(R * Win * bpe * (1 + kh))),
        )(x2d)
        return out2d.reshape(N, C, Hout, Wout)                      # free view

    # kw > 1: one exact one-hot gather matmul does BOTH the H and W repeats.
    g = _choose_row_fusion(R, Win, kh, kw)
    rows = R // g
    Kin, Kout = g * Win, g * kh * kw * Win

    # G[a*Win + wi, a*kh*kw*Win + r*kw*Win + wi*kw + c] = 1   (bf16, one 1/column)
    col = np.arange(Kout)
    src = (col // (kh * kw * Win)) * Win + (col % (kw * Win)) // kw
    G = jnp.asarray(np.arange(Kin)[:, None] == src[None, :], dtype=jnp.bfloat16)

    x2d = x.reshape(rows, Kin)                                      # free view
    in_row = _round_up(Kin, _LANE) * bpe
    out_row = _round_up(Kout, _LANE) * bpe
    sel_bytes = _round_up(Kin, _SUBLANE) * _round_up(Kout, _LANE) * 2 * 2
    rb = _pick_row_tile(rows, in_row, out_row, sel_bytes, budget)
    passes = 1 if x.dtype == jnp.bfloat16 else 3

    out2d = pl.pallas_call(
        _gather_matmul_kernel,
        out_shape=jax.ShapeDtypeStruct((rows, Kout), x.dtype),
        grid=(pl.cdiv(rows, rb),),
        in_specs=[pl.BlockSpec((rb, Kin), lambda i: (i, 0)),        # row tile
                  pl.BlockSpec((Kin, Kout), lambda i: (0, 0))],     # resident G
        out_specs=pl.BlockSpec((rb, Kout), lambda i: (i, 0)),
        compiler_params=pltpu.CompilerParams(
            dimension_semantics=("parallel",),
            vmem_limit_bytes=limit),
        cost_estimate=pl.CostEstimate(
            flops=int(2 * rows * Kout * Kin * passes), transcendentals=0,
            bytes_accessed=int(rows * (Kin + Kout) * bpe + Kin * Kout * 2)),
    )(x2d, G)
    # (rows, g*kh*kw*Win) row-major == (N, C, Hout, Wout) row-major: free view.
    return out2d.reshape(N, C, Hout, Wout)


# ---------------------------------------------------------------------------
# General path: arbitrary output size (non-integer ratios / downsampling).
# ---------------------------------------------------------------------------
def _nearest_general(x, Hout, Wout):
    N, C, Hin, Win = x.shape
    NC = N * C
    # PyTorch 'nearest': src = min(floor(dst * in / out), in - 1)
    idx_h = np.clip(np.floor(np.arange(Hout) * (Hin / Hout)).astype(np.int64), 0, Hin - 1)
    idx_w = np.clip(np.floor(np.arange(Wout) * (Win / Wout)).astype(np.int64), 0, Win - 1)
    sel_h = jnp.asarray(idx_h[:, None] == np.arange(Hin)[None, :], dtype=jnp.bfloat16)
    sel_wT = jnp.asarray(np.arange(Win)[:, None] == idx_w[None, :], dtype=jnp.bfloat16)

    bpe = x.dtype.itemsize
    budget, limit = _vmem_budget()
    plane_io = (Hin * _round_up(Win, _LANE) + Hout * _round_up(Wout, _LANE)) * bpe
    sel_bytes = (_round_up(Hout, _SUBLANE) * _round_up(Hin, _LANE)
                 + _round_up(Win, _SUBLANE) * _round_up(Wout, _LANE)) * 2 * 2
    P = _pick_plane_count(NC, plane_io, sel_bytes, budget)
    passes = 1 if x.dtype == jnp.bfloat16 else 3

    # TODO(synk): output is not lane-dense for very small Wout; fine for a fallback.
    x3 = x.reshape(NC, Hin, Win)
    out3 = pl.pallas_call(
        _nearest_general_kernel,
        out_shape=jax.ShapeDtypeStruct((NC, Hout, Wout), x.dtype),
        grid=(pl.cdiv(NC, P),),
        in_specs=[pl.BlockSpec((Hout, Hin), lambda i: (0, 0)),      # resident S_h
                  pl.BlockSpec((Win, Wout), lambda i: (0, 0)),      # resident S_wT
                  pl.BlockSpec((P, Hin, Win), lambda i: (i, 0, 0))],
        out_specs=pl.BlockSpec((P, Hout, Wout), lambda i: (i, 0, 0)),
        compiler_params=pltpu.CompilerParams(
            dimension_semantics=("parallel",),
            vmem_limit_bytes=limit),
        cost_estimate=pl.CostEstimate(
            flops=int(2 * NC * (Hout * Win * Hin + Hout * Wout * Win) * passes),
            transcendentals=0,
            bytes_accessed=int(NC * (Hin * Win + Hout * Wout) * bpe)),
    )(sel_h, sel_wT, x3)
    return out3.reshape(N, C, Hout, Wout)


# ---------------------------------------------------------------------------
# Public API (matches the PyTorch module semantics).
# ---------------------------------------------------------------------------
def _resolve_output_size(Hin, Win, size, scale_factor):
    if size is not None:
        if isinstance(size, int):
            return int(size), int(size)
        return int(size[0]), int(size[1])
    if scale_factor is not None:
        if isinstance(scale_factor, (int, float)):
            sf_h = sf_w = float(scale_factor)
        else:
            sf_h, sf_w = float(scale_factor[0]), float(scale_factor[1])
        return int(math.floor(Hin * sf_h)), int(math.floor(Win * sf_w))
    raise ValueError("either size or scale_factor must be given")


def interpolate_nearest(x, size=None, scale_factor=None):
    """Pallas equivalent of F.interpolate(x, size, scale_factor, mode='nearest')."""
    N, C, Hin, Win = x.shape
    Hout, Wout = _resolve_output_size(Hin, Win, size, scale_factor)
    if Hout == Hin and Wout == Win:
        return x
    if Hout % Hin == 0 and Wout % Win == 0:
        return _nearest_upsample_integer(x, Hout // Hin, Wout // Win)
    return _nearest_general(x, Hout, Wout)


class Interpolate:
    """Wrapper mirroring the PyTorch Interpolate module (mode='nearest')."""

    def __init__(self, size=None, scale_factor=None):
        self.size = size
        self.scale_factor = scale_factor

    def __call__(self, x):
        return interpolate_nearest(x, size=self.size, scale_factor=self.scale_factor)


if __name__ == "__main__":
    key = jax.random.PRNGKey(0)
    x = jax.random.normal(key, (2, 4, 16, 16), dtype=jnp.float32)

    # Module as used in the autoencoder decoder: scale_factor=2, mode='nearest'.
    interp = Interpolate(scale_factor=2)
    out = jax.block_until_ready(interp(x))
    ref = jnp.repeat(jnp.repeat(x, 2, axis=2), 2, axis=3)
    assert out.shape == (2, 4, 32, 32), out.shape
    np.testing.assert_allclose(np.asarray(out), np.asarray(ref), rtol=0, atol=0)

    # bf16 input: single default-precision MXU pass, no upcast.
    xb = x.astype(jnp.bfloat16)
    outb = jax.block_until_ready(interp(xb))
    refb = jnp.repeat(jnp.repeat(xb, 2, axis=2), 2, axis=3)
    np.testing.assert_allclose(np.asarray(outb.astype(jnp.float32)),
                               np.asarray(refb.astype(jnp.float32)), rtol=0, atol=0)

    # `size=` form with integer ratios (kh=3, kw=2): same fast path.
    out2 = jax.block_until_ready(interpolate_nearest(x, size=(48, 32)))
    ref2 = jnp.repeat(jnp.repeat(x, 3, axis=2), 2, axis=3)
    np.testing.assert_allclose(np.asarray(out2), np.asarray(ref2), rtol=0, atol=0)

    # Pure H repeat exercises the copy-only kw==1 kernel (no selector, no MXU).
    out3 = jax.block_until_ready(interpolate_nearest(x, size=(32, 16)))
    ref3 = jnp.repeat(x, 2, axis=2)
    np.testing.assert_allclose(np.asarray(out3), np.asarray(ref3), rtol=0, atol=0)

    # Non-integer ratio exercises the general one-hot-gather fallback.
    out4 = jax.block_until_ready(interpolate_nearest(x, size=(24, 20)))
    ih = np.floor(np.arange(24) * (16 / 24)).astype(np.int64)
    iw = np.floor(np.arange(20) * (16 / 20)).astype(np.int64)
    ref4 = np.asarray(x)[:, :, ih, :][:, :, :, iw]
    np.testing.assert_allclose(np.asarray(out4), ref4, rtol=0, atol=0)

    print("KERNEL_OK")
</pallas_src>

<mosaic_0001>
module attributes {stable_mosaic.version = 11 : i64} {
  func.func @_gather_matmul_kernel(%arg0: i32, %arg1: memref<32x64xf32, #tpu.memory_space<vmem>>, %arg2: memref<64x256xbf16, #tpu.memory_space<vmem>>, %arg3: memref<32x256xf32, #tpu.memory_space<vmem>>) attributes {dimension_semantics = [#tpu.dimension_semantics<parallel>], iteration_bounds = array<i64: 1>, scalar_prefetch = 0 : i64, scratch_operands = 0 : i64, tpu.core_type = #tpu.core_type<tc>, window_params = [{transform_indices = @transform_0, window_bounds = array<i64: 32, 64>}, {pipeline_mode = #tpu.pipeline_mode<synchronous>, transform_indices = @transform_1, window_bounds = array<i64: 64, 256>}, {transform_indices = @transform_2, window_bounds = array<i64: 32, 256>}]} {
    %c0 = arith.constant 0 : index
    %c0_0 = arith.constant 0 : index
    %0 = vector.load %arg2[%c0, %c0_0] : memref<64x256xbf16, #tpu.memory_space<vmem>>, vector<64x256xbf16>
    %c0_1 = arith.constant 0 : index
    %c0_2 = arith.constant 0 : index
    %1 = vector.load %arg1[%c0_1, %c0_2] : memref<32x64xf32, #tpu.memory_space<vmem>>, vector<32x64xf32>
    %2 = arith.truncf %1 : vector<32x64xf32> to vector<32x64xbf16>
    %3 = arith.extf %2 : vector<32x64xbf16> to vector<32x64xf32>
    %4 = arith.subf %1, %3 : vector<32x64xf32>
    %5 = arith.truncf %4 : vector<32x64xf32> to vector<32x64xbf16>
    %6 = arith.extf %5 : vector<32x64xbf16> to vector<32x64xf32>
    %7 = arith.subf %4, %6 : vector<32x64xf32>
    %8 = arith.truncf %7 : vector<32x64xf32> to vector<32x64xbf16>
    %cst = arith.constant dense<0.000000e+00> : vector<32x256xf32>
    %9 = tpu.matmul %8, %0, %cst {dimension_numbers = #tpu.dot_dimension_numbers<[1], [0], [0], [1], [0, 0, 1, 1], [], []>} : vector<32x64xbf16>, vector<64x256xbf16>, vector<32x256xf32> -> vector<32x256xf32>
    %cst_3 = arith.constant dense<0.000000e+00> : vector<32x256xf32>
    %10 = tpu.matmul %5, %0, %cst_3 {dimension_numbers = #tpu.dot_dimension_numbers<[1], [0], [0], [1], [0, 0, 1, 1], [], []>} : vector<32x64xbf16>, vector<64x256xbf16>, vector<32x256xf32> -> vector<32x256xf32>
    %11 = arith.addf %9, %10 : vector<32x256xf32>
    %cst_4 = arith.constant dense<0.000000e+00> : vector<32x256xf32>
    %12 = tpu.matmul %2, %0, %cst_4 {dimension_numbers = #tpu.dot_dimension_numbers<[1], [0], [0], [1], [0, 0, 1, 1], [], []>} : vector<32x64xbf16>, vector<64x256xbf16>, vector<32x256xf32> -> vector<32x256xf32>
    %13 = arith.addf %11, %12 : vector<32x256xf32>
    %c0_5 = arith.constant 0 : index
    %c0_6 = arith.constant 0 : index
    %14 = vector.load %arg3[%c0_5, %c0_6] : memref<32x256xf32, #tpu.memory_space<vmem>>, vector<32x256xf32>
    tpu.vector_store %arg3[%c0_5, %c0_6], %13 {strides = array<i32>} : memref<32x256xf32, #tpu.memory_space<vmem>>, vector<32x256xf32>,
    return
  }
  func.func @transform_0(%arg0: i32) -> (i32, i32) {
    %c0_i32 = arith.constant 0 : i32
    %c0_i32_0 = arith.constant 0 : i32
    return %arg0, %c0_i32 : i32, i32
  }
  func.func @transform_1(%arg0: i32) -> (i32, i32) {
    %c0_i32 = arith.constant 0 : i32
    %c0_i32_0 = arith.constant 0 : i32
    %c0_i32_1 = arith.constant 0 : i32
    return %c0_i32, %c0_i32_0 : i32, i32
  }
  func.func @transform_2(%arg0: i32) -> (i32, i32) {
    %c0_i32 = arith.constant 0 : i32
    %c0_i32_0 = arith.constant 0 : i32
    return %arg0, %c0_i32 : i32, i32
  }
}

</mosaic_0001>

<llo_original>
// kernel: tpu_custom_call.1
$region0: #{tpu_custom_call.1}
  #allocation0 [shape = 'u32[]', space=smem, size = 0x4, offset = 0x4, fixed_abs, tag = 'smem constant byte address 0x4 - core index']
  #allocation1 [shape = 'u32[144,128]{1,0:T(1,128)}', space=vmem, size = 0x12000, scoped, tag = 'internal scratch']
  %s0 = inlined_call_operand.hbm [shape: f32[32,64], index: 0, kind: input, shape index: {}]
  %s1 = inlined_call_operand.hbm [shape: bf16[64,256], index: 1, kind: input, shape index: {}]
  %s2 = inlined_call_operand.hbm [shape: f32[32,256], index: 2, kind: output, shape index: {}]
  %s3 = sld [smem:[#allocation0]]
  $region26: #{tpu_custom_call.1} parent=0
    _
  %s5 = ssub.s32 1, %s3
  %s6 = scalar_select 0, %s5, %s3
  $region1: #{tpu_custom_call.1} parent=0
    #allocation2 [shape = 'u8[16384]{0}', space=vmem, size = 0x4000, scoped, tag = 'input window, operand 0, single buffered']
    #allocation3 [shape = 's32[1]{0}', space=sflag, size = 0x4, scoped, tag = 'scoped memory for tpu_custom_call.1']
    #allocation4 [shape = 's32[1]{0}', space=sflag, size = 0x4, scoped, tag = 'scoped memory for tpu_custom_call.1']
    #allocation5 [shape = 'u8[32768]{0}', space=vmem, size = 0x8000, scoped, tag = 'input window, operand 1, single buffered']
    #allocation6 [shape = 's32[1]{0}', space=sflag, size = 0x4, scoped, tag = 'scoped memory for tpu_custom_call.1']
    #allocation7 [shape = 'u8[32768]{0}', space=vmem, size = 0x8000, scoped, tag = 'output window, operand 0, single buffered']
    %7 = vsyncpa [#allocation3], 0
    %8 = vsyncpa [#allocation6], 0
    %9 = vsyncpa [#allocation4], 0
    // Predicated region
    $region2: #{tpu_custom_call.1} parent=1 // pred_check
      _
    $region3: #{tpu_custom_call.1} parent=1 // pred_check_branch
      %11 = sbr.rel (0) target = $region5
    $region4: #{tpu_custom_call.1} parent=1 // pred_region
      %s13 = ssub.s32 512, 512
      %14 = vsyncadd [#allocation3], %s13
      %s15 = sshll.u32 [#allocation2], 4
      %s16 = int_to_ptr.vmem [resolvable:$true] %s15
      %21 = dma.hbm_to_vmem [thread:$0]  %s0, 512, %s16, [#allocation3], 128, 128, 8
    $region5: #{tpu_custom_call.1} parent=1 // pred_fallthru
      _
    // Predicated region
    $region6: #{tpu_custom_call.1} parent=1 // pred_check
      _
    $region7: #{tpu_custom_call.1} parent=1 // pred_check_branch
      %23 = sbr.rel (0) target = $region9
    $region8: #{tpu_custom_call.1} parent=1 // pred_region
      %s25 = ssub.s32 1024, 1024
      %26 = vsyncadd [#allocation6], %s25
      %s27 = sshll.u32 [#allocation5], 4
      %s28 = int_to_ptr.vmem [resolvable:$true] %s27
      %33 = dma.hbm_to_vmem [thread:$0]  %s1, 1024, %s28, [#allocation6], 128, 128, 8
    $region9: #{tpu_custom_call.1} parent=1 // pred_fallthru
      _
    // Predicated region
    $region10: #{tpu_custom_call.1} parent=1 // pred_check
      _
    $region11: #{tpu_custom_call.1} parent=1 // pred_check_branch
      %35 = sbr.rel (0) target = $region13
    $region12: #{tpu_custom_call.1} parent=1 // pred_region
      %36 = dma.done [#allocation3], 512
    $region13: #{tpu_custom_call.1} parent=1 // pred_fallthru
      _
    // Predicated region
    $region14: #{tpu_custom_call.1} parent=1 // pred_check
      _
    $region15: #{tpu_custom_call.1} parent=1 // pred_check_branch
      %38 = sbr.rel (0) target = $region17
    $region16: #{tpu_custom_call.1} parent=1 // pred_region
      %39 = dma.done [#allocation6], 1024
    $region17: #{tpu_custom_call.1} parent=1 // pred_fallthru
      _
    %v41 = vld [vmem:[#allocation5] sm:$0xff]
    %v42 = vld [vmem:[#allocation5 + $0x8] sm:$0xff]
    %v43 = vld [vmem:[#allocation5 + $0x10] sm:$0xff]
    %v44 = vld [vmem:[#allocation5 + $0x18] sm:$0xff]
    %v45 = vld [vmem:[#allocation5 + $0x20] sm:$0xff]
    %v46 = vld [vmem:[#allocation5 + $0x28] sm:$0xff]
    %v47 = vld [vmem:[#allocation5 + $0x30] sm:$0xff]
    %v48 = vld [vmem:[#allocation5 + $0x38] sm:$0xff]
    %v49 = vld [vmem:[#allocation2] sm:$0xff]
    %v50 = vld [vmem:[#allocation2 + $0x8] sm:$0xff]
    %v51 = vld [vmem:[#allocation2 + $0x10] sm:$0xff]
    %v52 = vld [vmem:[#allocation2 + $0x18] sm:$0xff]
    %v53 = vpack.c.bf16 %v50, %v49
    %v54 = vpack.c.bf16 %v52, %v51
    %v55 = vunpack.c.l.bf16 %v53
    %v56 = vunpack.c.h.bf16 %v53
    %v57 = vunpack.c.l.bf16 %v54
    %v58 = vunpack.c.h.bf16 %v54
    %v59 = vsub.f32 %v49, %v55
    %v60 = vsub.f32 %v50, %v56
    %v61 = vsub.f32 %v51, %v57
    %v62 = vsub.f32 %v52, %v58
    %v63 = vpack.c.bf16 %v60, %v59
    %v64 = vpack.c.bf16 %v62, %v61
    %v65 = vunpack.c.l.bf16 %v63
    %v66 = vunpack.c.h.bf16 %v63
    %v67 = vunpack.c.l.bf16 %v64
    %v68 = vunpack.c.h.bf16 %v64
    %v69 = vsub.f32 %v59, %v65
    %v70 = vsub.f32 %v60, %v66
    %v71 = vsub.f32 %v61, %v67
    %v72 = vsub.f32 %v62, %v68
    %v73 = vpack.c.bf16 %v70, %v69
    %v74 = vpack.c.bf16 %v72, %v71
    %v83 = vunpack.c.l.b16 %v41
    %v84 = vunpack.c.h.b16 %v41
    %v85 = vunpack.c.l.b16 %v42
    %v86 = vunpack.c.h.b16 %v42
    %v87 = vunpack.c.l.b16 %v43
    %v88 = vunpack.c.h.b16 %v43
    %v89 = vunpack.c.l.b16 %v44
    %v90 = vunpack.c.h.b16 %v44
    %v91 = vunpack.c.l.b16 %v45
    %v92 = vunpack.c.h.b16 %v45
    %v93 = vunpack.c.l.b16 %v46
    %v94 = vunpack.c.h.b16 %v46
    %v95 = vunpack.c.l.b16 %v47
    %v96 = vunpack.c.h.b16 %v47
    %v97 = vunpack.c.l.b16 %v48
    %v98 = vunpack.c.h.b16 %v48
    %v99 = vpack.c.b16 %v85, %v83
    %v100 = vpack.c.b16 %v86, %v84
    %v101 = vpack.c.b16 %v89, %v87
    %v102 = vpack.c.b16 %v90, %v88
    %v103 = vpack.c.b16 %v93, %v91
    %v104 = vpack.c.b16 %v94, %v92
    %v105 = vpack.c.b16 %v97, %v95
    %v106 = vpack.c.b16 %v98, %v96
    %vm115 = vcmask 523264
    %v117 = vsel %vm115, %v63, 0
    %v120 = vsel %vm115, %v64, 0
    %122 = vmatprep.subr.bf16.mxu0 %v100
    %123 = vmatpush1.bf16.msra.mxu0 %v99
    %124 = vmatprep.subr.bf16.mxu0 %v102
    %125 = vmatpush1.bf16.msra.mxu0 %v101
    %126 = vmatprep.subr.bf16.mxu0 %v104
    %127 = vmatpush1.bf16.msra.mxu0 %v103
    %128 = vmatprep.subr.bf16.mxu0 %v106
    %129 = vmatpush1.bf16.msra.mxu0 %v105
    %130 = vmatprep.subr.bf16.mxu0 0
    %131 = vmatpush1.bf16.msra.mxu0 0
    %132 = vmatprep.subr.bf16.mxu0 0
    %133 = vmatpush1.bf16.msra.mxu0 0
    %134 = vmatprep.subr.bf16.mxu0 0
    %135 = vmatpush1.bf16.msra.mxu0 0
    %136 = vmatprep.subr.bf16.mxu0 0
    %137 = vmatpush1.bf16.msra.mxu0 0
    %138 = vmatprep.subr.bf16.mxu0 0
    %139 = vmatpush1.bf16.msra.mxu0 0
    %140 = vmatprep.subr.bf16.mxu0 0
    %141 = vmatpush1.bf16.msra.mxu0 0
    %142 = vmatprep.subr.bf16.mxu0 0
    %143 = vmatpush1.bf16.msra.mxu0 0
    %144 = vmatprep.subr.bf16.mxu0 0
    %145 = vmatpush1.bf16.msra.mxu0 0
    %146 = vmatprep.subr.bf16.mxu0 0
    %147 = vmatpush1.bf16.msra.mxu0 0
    %148 = vmatprep.subr.bf16.mxu0 0
    %149 = vmatpush1.bf16.msra.mxu0 0
    %150 = vmatprep.subr.bf16.mxu0 0
    %151 = vmatpush1.bf16.msra.mxu0 0
    %152 = vmatprep.subr.bf16.mxu0 0
    %153 = vmatpush1.bf16.msra.mxu0 0
    %154 = vmatprep.mubr.bf16.mxu0 0
    %155 = vmatmul.mubr.bf16.gmra.mrb[0].mxu0 %v117
    %v156 = vpop.f32.mrb[0].mxu0
    %v157 = vadd.f32 0.0, %v156
    %v158 = vpop.f32.mrb[0].mxu0
    %v159 = vadd.f32 0.0, %v158
    %v160 = vpop.f32.mrb[0].mxu0
    %v161 = vadd.f32 0.0, %v160
    %v162 = vpop.f32.mrb[0].mxu0
    %v163 = vadd.f32 0.0, %v162
    %164 = vmatprep.mubr.bf16.mxu0 0
    %165 = vmatmul.mubr.bf16.gmra.mrb[0].mxu0 %v120
    %v166 = vpop.f32.mrb[0].mxu0
    %v167 = vadd.f32 0.0, %v166
    %v168 = vpop.f32.mrb[0].mxu0
    %v169 = vadd.f32 0.0, %v168
    %v170 = vpop.f32.mrb[0].mxu0
    %v171 = vadd.f32 0.0, %v170
    %v172 = vpop.f32.mrb[0].mxu0
    %v173 = vadd.f32 0.0, %v172
    %174 = vdwg.mxu0
    %v176 = vsel %vm115, %v73, 0
    %v179 = vsel %vm115, %v74, 0
    %181 = vmatprep.subr.bf16.mxu0 %v100
    %182 = vmatpush1.bf16.msra.mxu0 %v99
    %183 = vmatprep.subr.bf16.mxu0 %v102
    %184 = vmatpush1.bf16.msra.mxu0 %v101
    %185 = vmatprep.subr.bf16.mxu0 %v104
    %186 = vmatpush1.bf16.msra.mxu0 %v103
    %187 = vmatprep.subr.bf16.mxu0 %v106
    %188 = vmatpush1.bf16.msra.mxu0 %v105
    %189 = vmatprep.subr.bf16.mxu0 0
    %190 = vmatpush1.bf16.msra.mxu0 0
    %191 = vmatprep.subr.bf16.mxu0 0
    %192 = vmatpush1.bf16.msra.mxu0 0
    %193 = vmatprep.subr.bf16.mxu0 0
    %194 = vmatpush1.bf16.msra.mxu0 0
    %195 = vmatprep.subr.bf16.mxu0 0
    %196 = vmatpush1.bf16.msra.mxu0 0
    %197 = vmatprep.subr.bf16.mxu0 0
    %198 = vmatpush1.bf16.msra.mxu0 0
    %199 = vmatprep.subr.bf16.mxu0 0
    %200 = vmatpush1.bf16.msra.mxu0 0
    %201 = vmatprep.subr.bf16.mxu0 0
    %202 = vmatpush1.bf16.msra.mxu0 0
    %203 = vmatprep.subr.bf16.mxu0 0
    %204 = vmatpush1.bf16.msra.mxu0 0
    %205 = vmatprep.subr.bf16.mxu0 0
    %206 = vmatpush1.bf16.msra.mxu0 0
    %207 = vmatprep.subr.bf16.mxu0 0
    %208 = vmatpush1.bf16.msra.mxu0 0
    %209 = vmatprep.subr.bf16.mxu0 0
    %210 = vmatpush1.bf16.msra.mxu0 0
    %211 = vmatprep.subr.bf16.mxu0 0
    %212 = vmatpush1.bf16.msra.mxu0 0
    %213 = vmatprep.mubr.bf16.mxu0 0
    %214 = vmatmul.mubr.bf16.gmra.mrb[0].mxu0 %v176
    %v215 = vpop.f32.mrb[0].mxu0
    %v216 = vadd.f32 %v157, %v215
    %v217 = vpop.f32.mrb[0].mxu0
    %v218 = vadd.f32 %v159, %v217
    %v219 = vpop.f32.mrb[0].mxu0
    %v220 = vadd.f32 %v161, %v219
    %v221 = vpop.f32.mrb[0].mxu0
    %v222 = vadd.f32 %v163, %v221
    %223 = vmatprep.mubr.bf16.mxu0 0
    %224 = vmatmul.mubr.bf16.gmra.mrb[0].mxu0 %v179
    %v225 = vpop.f32.mrb[0].mxu0
    %v226 = vadd.f32 %v167, %v225
    %v227 = vpop.f32.mrb[0].mxu0
    %v228 = vadd.f32 %v169, %v227
    %v229 = vpop.f32.mrb[0].mxu0
    %v230 = vadd.f32 %v171, %v229
    %v231 = vpop.f32.mrb[0].mxu0
    %v232 = vadd.f32 %v173, %v231
    %233 = vdwg.mxu0
    %v235 = vsel %vm115, %v53, 0
    %v238 = vsel %vm115, %v54, 0
    %240 = vmatprep.subr.bf16.mxu0 %v100
    %241 = vmatpush1.bf16.msra.mxu0 %v99
    %242 = vmatprep.subr.bf16.mxu0 %v102
    %243 = vmatpush1.bf16.msra.mxu0 %v101
    %244 = vmatprep.subr.bf16.mxu0 %v104
    %245 = vmatpush1.bf16.msra.mxu0 %v103
    %246 = vmatprep.subr.bf16.mxu0 %v106
    %247 = vmatpush1.bf16.msra.mxu0 %v105
    %248 = vmatprep.subr.bf16.mxu0 0
    %249 = vmatpush1.bf16.msra.mxu0 0
    %250 = vmatprep.subr.bf16.mxu0 0
    %251 = vmatpush1.bf16.msra.mxu0 0
    %252 = vmatprep.subr.bf16.mxu0 0
    %253 = vmatpush1.bf16.msra.mxu0 0
    %254 = vmatprep.subr.bf16.mxu0 0
    %255 = vmatpush1.bf16.msra.mxu0 0
    %256 = vmatprep.subr.bf16.mxu0 0
    %257 = vmatpush1.bf16.msra.mxu0 0
    %258 = vmatprep.subr.bf16.mxu0 0
    %259 = vmatpush1.bf16.msra.mxu0 0
    %260 = vmatprep.subr.bf16.mxu0 0
    %261 = vmatpush1.bf16.msra.mxu0 0
    %262 = vmatprep.subr.bf16.mxu0 0
    %263 = vmatpush1.bf16.msra.mxu0 0
    %264 = vmatprep.subr.bf16.mxu0 0
    %265 = vmatpush1.bf16.msra.mxu0 0
    %266 = vmatprep.subr.bf16.mxu0 0
    %267 = vmatpush1.bf16.msra.mxu0 0
    %268 = vmatprep.subr.bf16.mxu0 0
    %269 = vmatpush1.bf16.msra.mxu0 0
    %270 = vmatprep.subr.bf16.mxu0 0
    %271 = vmatpush1.bf16.msra.mxu0 0
    %272 = vmatprep.mubr.bf16.mxu0 0
    %273 = vmatmul.mubr.bf16.gmra.mrb[0].mxu0 %v235
    %v274 = vpop.f32.mrb[0].mxu0
    %v275 = vadd.f32 0.0, %v274
    %v276 = vpop.f32.mrb[0].mxu0
    %v277 = vadd.f32 0.0, %v276
    %v278 = vpop.f32.mrb[0].mxu0
    %v279 = vadd.f32 0.0, %v278
    %v280 = vpop.f32.mrb[0].mxu0
    %v281 = vadd.f32 0.0, %v280
    %282 = vmatprep.mubr.bf16.mxu0 0
    %283 = vmatmul.mubr.bf16.gmra.mrb[0].mxu0 %v238
    %v284 = vpop.f32.mrb[0].mxu0
    %v285 = vadd.f32 0.0, %v284
    %v286 = vpop.f32.mrb[0].mxu0
    %v287 = vadd.f32 0.0, %v286
    %v288 = vpop.f32.mrb[0].mxu0
    %v289 = vadd.f32 0.0, %v288
    %v290 = vpop.f32.mrb[0].mxu0
    %v291 = vadd.f32 0.0, %v290
    %292 = vdwg.mxu0
    %v293 = vadd.f32 %v216, %v275
    %v294 = vadd.f32 %v218, %v277
    %v295 = vadd.f32 %v220, %v279
    %v296 = vadd.f32 %v222, %v281
    %v297 = vadd.f32 %v226, %v285
    %v298 = vadd.f32 %v228, %v287
    %v299 = vadd.f32 %v230, %v289
    %v300 = vadd.f32 %v232, %v291
    %301 = vst [vmem:[#allocation7] sm:$0xff] %v293
    %302 = vst [vmem:[#allocation7 + $0x8] sm:$0xff] %v294
    %303 = vst [vmem:[#allocation7 + $0x10] sm:$0xff] %v295
    %304 = vst [vmem:[#allocation7 + $0x18] sm:$0xff] %v296
    %305 = vst [vmem:[#allocation7 + $0x20] sm:$0xff] %v297
    %306 = vst [vmem:[#allocation7 + $0x28] sm:$0xff] %v298
    %307 = vst [vmem:[#allocation7 + $0x30] sm:$0xff] %v299
    %308 = vst [vmem:[#allocation7 + $0x38] sm:$0xff] %v300
    // Predicated region
    $region18: #{tpu_custom_call.1} parent=1 // pred_check
      _
    $region19: #{tpu_custom_call.1} parent=1 // pred_check_branch
      %310 = sbr.rel (0) target = $region21
    $region20: #{tpu_custom_call.1} parent=1 // pred_region
      %s312 = ssub.s32 1024, 1024
      %313 = vsyncadd [#allocation4], %s312
      %s314 = sshll.u32 [#allocation7], 4
      %s315 = int_to_ptr.vmem [resolvable:$true] %s314
      %320 = dma.vmem_to_hbm [thread:$0]  %s315, 1024, %s2, [#allocation4], 256, 256, 16
    $region21: #{tpu_custom_call.1} parent=1 // pred_fallthru
      _
    // Predicated region
    $region22: #{tpu_custom_call.1} parent=1 // pred_check
      _
    $region23: #{tpu_custom_call.1} parent=1 // pred_check_branch
      %322 = sbr.rel (0) target = $region25
    $region24: #{tpu_custom_call.1} parent=1 // pred_region
      %323 = dma.done [#allocation4], 1024
    $region25: #{tpu_custom_call.1} parent=1 // pred_fallthru
      _
    %324 = vsyncpa [#allocation3], 1
    %325 = vsyncpa [#allocation6], 1
    %326 = vsyncpa [#allocation4], 1

</llo_original>
